<compile_context>
chip_gen: v5e
topology: v5e:2x2
jax: 0.10.0
libtpu: 0.0.40
codegen_flags: <defaults>
</compile_context>

<pallas_src>
import functools

import jax
import jax.numpy as jnp
from jax.experimental import pallas as pl
from jax.experimental.pallas import tpu as pltpu

_TILE_BYTES = 1 << 20  # ~1 MiB per input block: safe on every generation.


def _pick_tile(n, quantum, max_tile):
    """Largest divisor of n that is a multiple of `quantum` and <= max_tile.

    Falls back to n itself (the full extent is always a legal block size,
    possibly at the cost of VMEM for very large, awkwardly-sized axes).
    """
    best = None
    upper = min(n, max_tile)
    for d in range(quantum, upper + 1, quantum):
        if n % d == 0:
            best = d
    return best if best is not None else n


def _lconv_kernel(x_ref, lo_ref, hi_ref, w_ref, m_ref, o_ref, *, tT, K, pad):
    """Depthwise conv along time + output masking for one (b, ct, tt) tile.

    x_ref  : (1, tT, tC)        input time/channel tile
    lo_ref : (1, 1, pad, tC)    halo rows just before the tile (zeros at t=0)
    hi_ref : (1, 1, pad, tC)    halo rows just after the tile  (zeros at end)
    w_ref  : (K, tC)            softmaxed per-channel kernel (float32)
    m_ref  : (1, tT, 1)         0/1 time mask
    o_ref  : (1, tT, tC)        output tile
    """
    x = x_ref[0]                                           # (tT, tC)
    if pad > 0:
        # Padded window for this tile; halo rows already hold either the
        # neighbouring tile's rows or zeros (sequence boundary).
        xp = jnp.concatenate([lo_ref[0, 0], x, hi_ref[0, 0]], axis=0)
    else:
        xp = x                                             # K == 1: no halo

    w = w_ref[...]                                         # (K, tC) f32, hoisted

    # Cross-correlation (F.conv1d semantics, no kernel flip).  K is small and
    # static -> unrolled shift-and-accumulate.  Products promote to f32
    # per-slice (w is f32), so there is no full-tile upcast.
    acc = xp[0:tT, :] * w[0:1, :]
    for k in range(1, K):
        acc = acc + xp[k:k + tT, :] * w[k:k + 1, :]

    m = m_ref[0]                                           # (tT, 1), 0/1
    o_ref[0] = (acc * m).astype(o_ref.dtype)


def lconv_forward(query, mask, weight, *, wshare, kernel_size,
                  time_tile=None, chan_tile=None):
    """LConv.forward (key/value unused, just like the PyTorch module).

    query  : (B, T, C)
    mask   : (B, 1, T) (or None); 0 entries zero the corresponding output rows
    weight : (wshare, 1, kernel_size) raw parameter (softmax applied here)
    returns: (B, T, C)
    """
    B, T, C = query.shape
    H, K = wshare, kernel_size
    assert C % H == 0
    assert K % 2 == 1, "even kernel_size breaks the original module's .view()"
    pad = K // 2
    itemsize = jnp.dtype(query.dtype).itemsize

    # ---- tile selection: lane-dense channels, 8-aligned time, ~1 MiB blocks ----
    # TODO(synk): for C < 128 one could fold heads/batch into the lane dim to
    # get fully unmasked stores; production d_model is normally >= 128.
    if chan_tile is None:
        tC = _pick_tile(C, 128, 512)
    else:
        assert C % chan_tile == 0
        tC = chan_tile
    if time_tile is None:
        max_tt = max(8, (_TILE_BYTES // (tC * itemsize)) // 8 * 8)
        tT = _pick_tile(T, 8, max_tt)
    else:
        assert T % time_tile == 0
        tT = time_tile
    if tT < T and tT < pad:
        tT = T  # halo would span more than one neighbouring tile; don't tile T
    n_tt, n_ct = T // tT, C // tC

    # ---- parameter prep (tiny glue) ----
    w = jax.nn.softmax(weight[:, 0, :].astype(jnp.float32), axis=-1)   # (H, K)
    # channel c uses head (c % H): wmat[k, c] = w[c % H, k]
    wmat = jnp.tile(w.T, (1, C // H))                                   # (K, C)

    # ---- halo slabs: the pad rows each time-tile needs from its neighbours ----
    # (B, n_tt, pad, C) each — negligible HBM traffic, replaces the old full
    # zero-padded copy of the input.
    hpad = max(pad, 1)
    qr = query.reshape(B, n_tt, tT, C)
    zrow = jnp.zeros((B, 1, hpad, C), query.dtype)
    if pad > 0:
        halo_lo = jnp.concatenate([zrow, qr[:, :-1, tT - pad:, :]], axis=1)
        halo_hi = jnp.concatenate([qr[:, 1:, :pad, :], zrow], axis=1)
    else:
        halo_lo = jnp.zeros((B, n_tt, hpad, C), query.dtype)
        halo_hi = halo_lo

    # ---- mask: (B, 1, T) -> (B, T, 1), 0/1, applied as a multiply ----
    if mask is None:
        mask_t = jnp.ones((B, T, 1), jnp.float32)
    else:
        mask_t = jnp.transpose(mask, (0, 2, 1)).astype(jnp.float32)

    grid_spec = pltpu.PrefetchScalarGridSpec(
        num_scalar_prefetch=0,
        grid=(B, n_ct, n_tt),
        in_specs=[
            pl.BlockSpec((1, tT, tC), lambda b, c, t: (b, t, c)),        # query
            pl.BlockSpec((1, 1, hpad, tC), lambda b, c, t: (b, t, 0, c)),  # halo lo
            pl.BlockSpec((1, 1, hpad, tC), lambda b, c, t: (b, t, 0, c)),  # halo hi
            pl.BlockSpec((K, tC), lambda b, c, t: (0, c)),               # weights
            pl.BlockSpec((1, tT, 1), lambda b, c, t: (b, t, 0)),         # mask
        ],
        out_specs=pl.BlockSpec((1, tT, tC), lambda b, c, t: (b, t, c)),
    )

    return pl.pallas_call(
        functools.partial(_lconv_kernel, tT=tT, K=K, pad=pad),
        out_shape=jax.ShapeDtypeStruct((B, T, C), query.dtype),
        grid_spec=grid_spec,
        compiler_params=pltpu.CompilerParams(
            dimension_semantics=("parallel", "parallel", "parallel")),
    )(query, halo_lo, halo_hi, wmat, mask_t)


def _lconv_reference(query, mask, weight, *, wshare, kernel_size):
    """Pure-JAX reference using lax depthwise conv (matches PyTorch path)."""
    B, T, C = query.shape
    H, K = wshare, kernel_size
    pad = K // 2
    w = jax.nn.softmax(weight[:, 0, :], axis=-1)               # (H, K)
    rhs = jnp.tile(w, (C // H, 1))[:, None, :]                  # (C, 1, K)
    lhs = jnp.transpose(query, (0, 2, 1))                       # (B, C, T)
    out = jax.lax.conv_general_dilated(
        lhs, rhs, window_strides=(1,), padding=[(pad, pad)],
        dimension_numbers=("NCH", "OIH", "NCH"),
        feature_group_count=C)                                  # (B, C, T)
    out = jnp.transpose(out, (0, 2, 1))                         # (B, T, C)
    if mask is not None:
        m = jnp.transpose(mask, (0, 2, 1))                      # (B, T, 1)
        out = jnp.where(m == 0, 0.0, out)
    return out


if __name__ == "__main__":
    def _check(B, T, C, H, K, *, time_tile=None, chan_tile=None):
        key = jax.random.PRNGKey(0)
        kq, kw = jax.random.split(key)
        query = jax.random.normal(kq, (B, T, C), dtype=jnp.float32)
        # weight ~ Uniform(0, 1), as in nn.Parameter(...).uniform_(0, 1)
        weight = jax.random.uniform(kw, (H, 1, K), dtype=jnp.float32)
        # mask (batch, 1, time): 1 = keep, 0 = zero-out
        mask = jnp.ones((B, 1, T), dtype=jnp.float32)
        mask = mask.at[-1, 0, (3 * T) // 4:].set(0.0)

        out = lconv_forward(query, mask, weight, wshare=H, kernel_size=K,
                            time_tile=time_tile, chan_tile=chan_tile)
        out = jax.block_until_ready(out)

        ref = _lconv_reference(query, mask, weight, wshare=H, kernel_size=K)
        assert out.shape == (B, T, C)
        assert jnp.allclose(out, ref, atol=1e-5, rtol=1e-5), (B, T, C, H, K)

    # Toy shapes consistent with the module (single tile, auto tiling).
    _check(2, 16, 32, 4, 3)
    # Small multi-tile config to exercise the time/channel tiling + halo path.
    _check(2, 32, 256, 4, 5, time_tile=8, chan_tile=128)

    print("KERNEL_OK")
</pallas_src>

<mosaic_0001>
module attributes {stable_mosaic.version = 11 : i64} {
  func.func @_lconv_kernel(%arg0: i32, %arg1: i32, %arg2: i32, %arg3: memref<1x16x32xf32, #tpu.memory_space<vmem>>, %arg4: memref<1x1x1x32xf32, #tpu.memory_space<vmem>>, %arg5: memref<1x1x1x32xf32, #tpu.memory_space<vmem>>, %arg6: memref<3x32xf32, #tpu.memory_space<vmem>>, %arg7: memref<1x16x1xf32, #tpu.memory_space<vmem>>, %arg8: memref<1x16x32xf32, #tpu.memory_space<vmem>>) attributes {dimension_semantics = [#tpu.dimension_semantics<parallel>, #tpu.dimension_semantics<parallel>, #tpu.dimension_semantics<parallel>], iteration_bounds = array<i64: 2, 1, 1>, scalar_prefetch = 0 : i64, scratch_operands = 0 : i64, tpu.core_type = #tpu.core_type<tc>, window_params = [{transform_indices = @transform_0, window_bounds = array<i64: 1, 16, 32>}, {transform_indices = @transform_1, window_bounds = array<i64: 1, 1, 1, 32>}, {transform_indices = @transform_2, window_bounds = array<i64: 1, 1, 1, 32>}, {transform_indices = @transform_3, window_bounds = array<i64: 3, 32>}, {transform_indices = @transform_4, window_bounds = array<i64: 1, 16, 1>}, {transform_indices = @transform_5, window_bounds = array<i64: 1, 16, 32>}]} {
    %c0 = arith.constant 0 : index
    %c0_0 = arith.constant 0 : index
    %c0_1 = arith.constant 0 : index
    %0 = vector.load %arg3[%c0, %c0_0, %c0_1] : memref<1x16x32xf32, #tpu.memory_space<vmem>>, vector<1x16x32xf32>
    %1 = vector.shape_cast %0 : vector<1x16x32xf32> to vector<16x32xf32>
    %c0_2 = arith.constant 0 : index
    %c0_3 = arith.constant 0 : index
    %c0_4 = arith.constant 0 : index
    %c0_5 = arith.constant 0 : index
    %2 = vector.load %arg4[%c0_2, %c0_3, %c0_4, %c0_5] : memref<1x1x1x32xf32, #tpu.memory_space<vmem>>, vector<1x1x1x32xf32>
    %3 = vector.shape_cast %2 : vector<1x1x1x32xf32> to vector<1x32xf32>
    %c0_6 = arith.constant 0 : index
    %c0_7 = arith.constant 0 : index
    %c0_8 = arith.constant 0 : index
    %c0_9 = arith.constant 0 : index
    %4 = vector.load %arg5[%c0_6, %c0_7, %c0_8, %c0_9] : memref<1x1x1x32xf32, #tpu.memory_space<vmem>>, vector<1x1x1x32xf32>
    %5 = vector.shape_cast %4 : vector<1x1x1x32xf32> to vector<1x32xf32>
    %6 = tpu.concatenate %3, %1, %5 in 0 : vector<1x32xf32>, vector<16x32xf32>, vector<1x32xf32> -> vector<18x32xf32>
    %c0_10 = arith.constant 0 : index
    %c0_11 = arith.constant 0 : index
    %7 = vector.load %arg6[%c0_10, %c0_11] : memref<3x32xf32, #tpu.memory_space<vmem>>, vector<3x32xf32>
    %8 = vector.extract_strided_slice %6 {offsets = [0, 0], sizes = [16, 32], strides = [1, 1]} : vector<18x32xf32> to vector<16x32xf32>
    %9 = vector.extract_strided_slice %7 {offsets = [0, 0], sizes = [1, 32], strides = [1, 1]} : vector<3x32xf32> to vector<1x32xf32>
    %10 = vector.broadcast %9 : vector<1x32xf32> to vector<16x32xf32>
    %11 = arith.mulf %8, %10 : vector<16x32xf32>
    %12 = vector.extract_strided_slice %6 {offsets = [1, 0], sizes = [16, 32], strides = [1, 1]} : vector<18x32xf32> to vector<16x32xf32>
    %13 = vector.extract_strided_slice %7 {offsets = [1, 0], sizes = [1, 32], strides = [1, 1]} : vector<3x32xf32> to vector<1x32xf32>
    %14 = vector.broadcast %13 : vector<1x32xf32> to vector<16x32xf32>
    %15 = arith.mulf %12, %14 : vector<16x32xf32>
    %16 = arith.addf %11, %15 : vector<16x32xf32>
    %17 = vector.extract_strided_slice %6 {offsets = [2, 0], sizes = [16, 32], strides = [1, 1]} : vector<18x32xf32> to vector<16x32xf32>
    %18 = vector.extract_strided_slice %7 {offsets = [2, 0], sizes = [1, 32], strides = [1, 1]} : vector<3x32xf32> to vector<1x32xf32>
    %19 = vector.broadcast %18 : vector<1x32xf32> to vector<16x32xf32>
    %20 = arith.mulf %17, %19 : vector<16x32xf32>
    %21 = arith.addf %16, %20 : vector<16x32xf32>
    %c0_12 = arith.constant 0 : index
    %c0_13 = arith.constant 0 : index
    %c0_14 = arith.constant 0 : index
    %22 = vector.load %arg7[%c0_12, %c0_13, %c0_14] : memref<1x16x1xf32, #tpu.memory_space<vmem>>, vector<1x16x1xf32>
    %23 = vector.shape_cast %22 : vector<1x16x1xf32> to vector<16x1xf32>
    %24 = vector.broadcast %23 : vector<16x1xf32> to vector<16x32xf32>
    %25 = arith.mulf %21, %24 : vector<16x32xf32>
    %c0_15 = arith.constant 0 : index
    %c0_16 = arith.constant 0 : index
    %c0_17 = arith.constant 0 : index
    %26 = vector.load %arg8[%c0_15, %c0_16, %c0_17] : memref<1x16x32xf32, #tpu.memory_space<vmem>>, vector<1x16x32xf32>
    %27 = vector.shape_cast %26 : vector<1x16x32xf32> to vector<16x32xf32>
    %28 = vector.shape_cast %25 : vector<16x32xf32> to vector<1x16x32xf32>
    tpu.vector_store %arg8[%c0_15, %c0_16, %c0_17], %28 {strides = array<i32>} : memref<1x16x32xf32, #tpu.memory_space<vmem>>, vector<1x16x32xf32>,
    return
  }
  func.func @transform_0(%arg0: i32, %arg1: i32, %arg2: i32) -> (i32, i32, i32) {
    %c0_i32 = arith.constant 0 : i32
    return %arg0, %arg2, %arg1 : i32, i32, i32
  }
  func.func @transform_1(%arg0: i32, %arg1: i32, %arg2: i32) -> (i32, i32, i32, i32) {
    %c0_i32 = arith.constant 0 : i32
    %c0_i32_0 = arith.constant 0 : i32
    return %arg0, %arg2, %c0_i32, %arg1 : i32, i32, i32, i32
  }
  func.func @transform_2(%arg0: i32, %arg1: i32, %arg2: i32) -> (i32, i32, i32, i32) {
    %c0_i32 = arith.constant 0 : i32
    %c0_i32_0 = arith.constant 0 : i32
    return %arg0, %arg2, %c0_i32, %arg1 : i32, i32, i32, i32
  }
  func.func @transform_3(%arg0: i32, %arg1: i32, %arg2: i32) -> (i32, i32) {
    %c0_i32 = arith.constant 0 : i32
    %c0_i32_0 = arith.constant 0 : i32
    return %c0_i32, %arg1 : i32, i32
  }
  func.func @transform_4(%arg0: i32, %arg1: i32, %arg2: i32) -> (i32, i32, i32) {
    %c0_i32 = arith.constant 0 : i32
    %c0_i32_0 = arith.constant 0 : i32
    return %arg0, %arg2, %c0_i32 : i32, i32, i32
  }
  func.func @transform_5(%arg0: i32, %arg1: i32, %arg2: i32) -> (i32, i32, i32) {
    %c0_i32 = arith.constant 0 : i32
    return %arg0, %arg2, %arg1 : i32, i32, i32
  }
}

</mosaic_0001>

<llo_original>
// kernel: tpu_custom_call.1
$region0: #{tpu_custom_call.1}
  #allocation0 [shape = 'u32[]', space=smem, size = 0x4, offset = 0x4, fixed_abs, tag = 'smem constant byte address 0x4 - core index']
  #allocation1 [shape = 'u32[72,128]{1,0:T(1,128)}', space=vmem, size = 0x9000, scoped, tag = 'internal scratch']
  %s0 = inlined_call_operand.vmem [shape: f32[2,16,32], index: 0, kind: input, shape index: {}]
  %s1 = inlined_call_operand.vmem [shape: f32[2,1,1,32], index: 1, kind: input, shape index: {}]
  %s2 = inlined_call_operand.hbm [shape: f32[2,1,1,32], index: 2, kind: input, shape index: {}]
  %s3 = inlined_call_operand.hbm [shape: f32[3,32], index: 3, kind: input, shape index: {}]
  %s4 = inlined_call_operand.vmem [shape: f32[2,16,1], index: 4, kind: input, shape index: {}]
  %s5 = inlined_call_operand.hbm [shape: f32[2,16,32], index: 5, kind: output, shape index: {}]
  %s6 = sld [smem:[#allocation0]]
  $region61: #{tpu_custom_call.1} parent=0
    _
  %s8 = ssub.s32 1, %s6
  %s9 = scalar_select 0, %s8, %s6
  $region1: #{tpu_custom_call.1} parent=0
    #allocation2 [shape = 'u8[1024]{0}', space=vmem, size = 0x400, scoped, tag = 'input window, operand 2']
    #allocation3 [shape = 's32[2]{0}', space=sflag, size = 0x8, scoped, tag = 'scoped memory for tpu_custom_call.1']
    #allocation4 [shape = 's32[2]{0}', space=sflag, size = 0x8, scoped, tag = 'scoped memory for tpu_custom_call.1']
    #allocation5 [shape = 'u8[2048]{0}', space=vmem, size = 0x800, scoped, tag = 'input window, operand 3, single buffered']
    #allocation6 [shape = 's32[1]{0}', space=sflag, size = 0x4, scoped, tag = 'scoped memory for tpu_custom_call.1']
    #allocation7 [shape = 'u8[16384]{0}', space=vmem, size = 0x4000, scoped, tag = 'output window, operand 0']
    %10 = vsyncpa [#allocation3], 0
    %s11 = scalar_lea.sflag [#allocation3], 1
    %12 = vsyncpa %s11, 0
    %13 = vsyncpa [#allocation6], 0
    %14 = vsyncpa [#allocation4], 0
    %s15 = scalar_lea.sflag [#allocation4], 1
    %16 = vsyncpa %s15, 0
    loop: start=0, step=1, limit=4
    $region2: #{tpu_custom_call.1} parent=1 // loop_pre_header
      _
    $region3: #{tpu_custom_call.1} parent=1 // loop_header
      %s18 = sphi 0, %s22
      %p19 = scmp.ge.s32.totalorder %s18, 4
      %s25 = sphi 0, %s44
      %s26 = sphi 0, %s40
      %s27 = sphi 0, %s36
      %s28 = sphi 0, %s25
      %s29 = sphi 0, %s26
      %s30 = sphi 0, %s27
      %s31 = sphi 0, %s28
      %s32 = sphi 0, %s29
      %s33 = sphi 0, %s30
      %s51 = sphi 0, %s53
      %s54 = sphi 0, %s51
      %s55 = sphi 0, %s54
      %s71 = sphi 0, %s55
      %s81 = sphi 0, %s83
      %s84 = sphi 0, %s81
      %s85 = sphi 0, %s84
      %s101 = sphi 0, %s85
      %s111 = sphi 0, %s113
      %s114 = sphi 0, %s111
      %s115 = sphi 0, %s114
      %s131 = sphi 0, %s115
      %s137 = sphi 0, %s139
      %s140 = sphi 0, %s137
      %s141 = sphi 0, %s140
      %s157 = sphi 0, %s141
      %s165 = sphi 0, %s167
      %s168 = sphi 0, %s165
      %s169 = sphi 0, %s168
      %s185 = sphi 0, %s169
      %s195 = sphi 0, %s197
      %s198 = sphi 0, %s195
      %s199 = sphi 0, %s198
      %s215 = sphi 0, %s199
    $region4: #{tpu_custom_call.1} parent=1 // loop_header_branch
      %21 = sbr.rel (%p19) target = $region8
    $region5: #{tpu_custom_call.1} parent=1 // loop_body
      %s23 = ssub.s32 %s18, 1
      %s24 = ssub.s32 %s18, 2
      %s34 = sadd.s32 1, %s27
      %p35 = scmp.ge.s32.totalorder %s34, 1
      %s36 = scalar_select %p35, 0, %s34
      %s37 = sadd.s32 1, %s26
      %s38 = scalar_select %p35, %s37, %s26
      %p39 = scmp.ge.s32.totalorder %s38, 1
      %s40 = scalar_select %p39, 0, %s38
      %s41 = sadd.s32 1, %s25
      %s42 = scalar_select %p39, %s41, %s25
      %p43 = scmp.ge.s32.totalorder %s42, 2
      %s44 = scalar_select %p43, 0, %s42
      %s45 = ssub.s32 %s25, %s44
      %s46 = ssub.s32 %s27, %s36
      %s47 = sor.u32 %s45, %s46
      %s48 = ssub.s32 %s26, %s40
      %s49 = sor.u32 %s47, %s48
      %p50 = scmp.eq.s32.totalorder %s49, 0
      %s52 = sadd.s32 %s51, 1
      %s53 = scalar_select %p50, %s51, %s52
      %p56 = pneg %p50
      %p57 = scmp.eq.s32.totalorder %s18, 1
      %p58 = por %p56, %p57
      %p59 = scmp.ne.s32.totalorder %s51, %s54
      %p60 = scmp.eq.s32.totalorder %s18, 0
      %p61 = por %p59, %p60
      %p62 = scmp.ne.s32.totalorder %s51, %s54
      %p63 = scmp.eq.s32.totalorder %s23, 1
      %p64 = por %p62, %p63
      %p65 = scmp.ne.s32.totalorder %s54, %s55
      %p66 = scmp.eq.s32.totalorder %s23, 0
      %p67 = por %p65, %p66
      %p68 = scmp.ne.s32.totalorder %s54, %s55
      %p69 = scmp.eq.s32.totalorder %s24, 1
      %p70 = por %p68, %p69
      %p72 = scmp.ne.s32.totalorder %s55, %s71
      %p73 = scmp.eq.s32.totalorder %s24, 0
      %p74 = por %p72, %p73
      %s75 = ssub.s32 %s25, %s44
      %s76 = ssub.s32 %s27, %s36
      %s77 = sor.u32 %s75, %s76
      %s78 = ssub.s32 %s26, %s40
      %s79 = sor.u32 %s77, %s78
      %p80 = scmp.eq.s32.totalorder %s79, 0
      %s82 = sadd.s32 %s81, 1
      %s83 = scalar_select %p80, %s81, %s82
      %p86 = pneg %p80
      %p87 = scmp.eq.s32.totalorder %s18, 1
      %p88 = por %p86, %p87
      %p89 = scmp.ne.s32.totalorder %s81, %s84
      %p90 = scmp.eq.s32.totalorder %s18, 0
      %p91 = por %p89, %p90
      %p92 = scmp.ne.s32.totalorder %s81, %s84
      %p93 = scmp.eq.s32.totalorder %s23, 1
      %p94 = por %p92, %p93
      %p95 = scmp.ne.s32.totalorder %s84, %s85
      %p96 = scmp.eq.s32.totalorder %s23, 0
      %p97 = por %p95, %p96
      %p98 = scmp.ne.s32.totalorder %s84, %s85
      %p99 = scmp.eq.s32.totalorder %s24, 1
      %p100 = por %p98, %p99
      %p102 = scmp.ne.s32.totalorder %s85, %s101
      %p103 = scmp.eq.s32.totalorder %s24, 0
      %p104 = por %p102, %p103
      %s105 = ssub.s32 %s25, %s44
      %s106 = ssub.s32 %s27, %s36
      %s107 = sor.u32 %s105, %s106
      %s108 = ssub.s32 %s26, %s40
      %s109 = sor.u32 %s107, %s108
      %p110 = scmp.eq.s32.totalorder %s109, 0
      %s112 = sadd.s32 %s111, 1
      %s113 = scalar_select %p110, %s111, %s112
      %p116 = pneg %p110
      %p117 = scmp.eq.s32.totalorder %s18, 1
      %p118 = por %p116, %p117
      %p119 = scmp.ne.s32.totalorder %s111, %s114
      %p120 = scmp.eq.s32.totalorder %s18, 0
      %p121 = por %p119, %p120
      %p122 = scmp.ne.s32.totalorder %s111, %s114
      %p123 = scmp.eq.s32.totalorder %s23, 1
      %p124 = por %p122, %p123
      %p125 = scmp.ne.s32.totalorder %s114, %s115
      %p126 = scmp.eq.s32.totalorder %s23, 0
      %p127 = por %p125, %p126
      %p128 = scmp.ne.s32.totalorder %s114, %s115
      %p129 = scmp.eq.s32.totalorder %s24, 1
      %p130 = por %p128, %p129
      %p132 = scmp.ne.s32.totalorder %s115, %s131
      %p133 = scmp.eq.s32.totalorder %s24, 0
      %p134 = por %p132, %p133
      %s135 = ssub.s32 %s26, %s40
      %p136 = scmp.eq.s32.totalorder %s135, 0
      %s138 = sadd.s32 %s137, 1
      %s139 = scalar_select %p136, %s137, %s138
      %p142 = pneg %p136
      %p143 = scmp.eq.s32.totalorder %s18, 1
      %p144 = por %p142, %p143
      %p145 = scmp.ne.s32.totalorder %s137, %s140
      %p146 = scmp.eq.s32.totalorder %s18, 0
      %p147 = por %p145, %p146
      %p148 = scmp.ne.s32.totalorder %s137, %s140
      %p149 = scmp.eq.s32.totalorder %s23, 1
      %p150 = por %p148, %p149
      %p151 = scmp.ne.s32.totalorder %s140, %s141
      %p152 = scmp.eq.s32.totalorder %s23, 0
      %p153 = por %p151, %p152
      %p154 = scmp.ne.s32.totalorder %s140, %s141
      %p155 = scmp.eq.s32.totalorder %s24, 1
      %p156 = por %p154, %p155
      %p158 = scmp.ne.s32.totalorder %s141, %s157
      %p159 = scmp.eq.s32.totalorder %s24, 0
      %p160 = por %p158, %p159
      %s161 = ssub.s32 %s25, %s44
      %s162 = ssub.s32 %s27, %s36
      %s163 = sor.u32 %s161, %s162
      %p164 = scmp.eq.s32.totalorder %s163, 0
      %s166 = sadd.s32 %s165, 1
      %s167 = scalar_select %p164, %s165, %s166
      %p170 = pneg %p164
      %p171 = scmp.eq.s32.totalorder %s18, 1
      %p172 = por %p170, %p171
      %p173 = scmp.ne.s32.totalorder %s165, %s168
      %p174 = scmp.eq.s32.totalorder %s18, 0
      %p175 = por %p173, %p174
      %p176 = scmp.ne.s32.totalorder %s165, %s168
      %p177 = scmp.eq.s32.totalorder %s23, 1
      %p178 = por %p176, %p177
      %p179 = scmp.ne.s32.totalorder %s168, %s169
      %p180 = scmp.eq.s32.totalorder %s23, 0
      %p181 = por %p179, %p180
      %p182 = scmp.ne.s32.totalorder %s168, %s169
      %p183 = scmp.eq.s32.totalorder %s24, 1
      %p184 = por %p182, %p183
      %p186 = scmp.ne.s32.totalorder %s169, %s185
      %p187 = scmp.eq.s32.totalorder %s24, 0
      %p188 = por %p186, %p187
      %s189 = ssub.s32 %s25, %s44
      %s190 = ssub.s32 %s27, %s36
      %s191 = sor.u32 %s189, %s190
      %s192 = ssub.s32 %s26, %s40
      %s193 = sor.u32 %s191, %s192
      %p194 = scmp.eq.s32.totalorder %s193, 0
      %s196 = sadd.s32 %s195, 1
      %s197 = scalar_select %p194, %s195, %s196
      %p200 = pneg %p194
      %p201 = scmp.eq.s32.totalorder %s18, 1
      %p202 = por %p200, %p201
      %p203 = scmp.ne.s32.totalorder %s195, %s198
      %p204 = scmp.eq.s32.totalorder %s18, 0
      %p205 = por %p203, %p204
      %p206 = scmp.ne.s32.totalorder %s195, %s198
      %p207 = scmp.eq.s32.totalorder %s23, 1
      %p208 = por %p206, %p207
      %p209 = scmp.ne.s32.totalorder %s198, %s199
      %p210 = scmp.eq.s32.totalorder %s23, 0
      %p211 = por %p209, %p210
      %p212 = scmp.ne.s32.totalorder %s198, %s199
      %p213 = scmp.eq.s32.totalorder %s24, 1
      %p214 = por %p212, %p213
      %p216 = scmp.ne.s32.totalorder %s199, %s215
      %p217 = scmp.eq.s32.totalorder %s24, 0
      %p218 = por %p216, %p217
      %p219 = scmp.le.s32.totalorder 1, %s18
      %p220 = scmp.lt.s32.totalorder %s18, 3
      %p221 = pnand %p219, %p220
      %p222 = pneg %p221
      // Predicated region
      $region9: #{tpu_custom_call.1} parent=5 // pred_check
        _
      $region10: #{tpu_custom_call.1} parent=5 // pred_check_branch
        %224 = sbr.rel (%p221) target = $region12
      $region11: #{tpu_custom_call.1} parent=5 // pred_region
        %s225 = ssub.s32 %s18, 1
        // Predicated region
        $region13: #{tpu_custom_call.1} parent=11 // pred_check
          %p226 = pneg %p153
        $region14: #{tpu_custom_call.1} parent=11 // pred_check_branch
          %228 = sbr.rel (%p226) target = $region16
        $region15: #{tpu_custom_call.1} parent=11 // pred_region
          %230 = vsyncadd [#allocation6], 0
          %s231 = smul.addr %s29, 4
          %s232 = scalar_lea.hbm %s3, %s231
          %s234 = sshll.u32 %s232, 4
          %s235 = int_to_ptr.hbm [resolvable:$true] %s234
          %s236 = sshll.u32 [#allocation5], 4
          %s237 = int_to_ptr.vmem [resolvable:$true] %s236
          %239 = dma.hbm_to_vmem [thread:$0]  %s235, 64, %s237, [#allocation6]
        $region16: #{tpu_custom_call.1} parent=11 // pred_fallthru
          _
      $region12: #{tpu_custom_call.1} parent=5 // pred_fallthru
        _
      %p240 = scmp.lt.s32.totalorder %s18, 2
      // Predicated region
      $region17: #{tpu_custom_call.1} parent=5 // pred_check
        %p241 = pneg %p240
      $region18: #{tpu_custom_call.1} parent=5 // pred_check_branch
        %243 = sbr.rel (%p241) target = $region20
      $region19: #{tpu_custom_call.1} parent=5 // pred_region
        // Predicated region
        $region21: #{tpu_custom_call.1} parent=19 // pred_check
          %p244 = pneg %p61
        $region22: #{tpu_custom_call.1} parent=19 // pred_check_branch
          %246 = sbr.rel (%p244) target = $region24
        $region23: #{tpu_custom_call.1} parent=19 // pred_region
          %s247 = smul.u32 2, %s27
          %p248 = scmp.lt.s32.totalorder %s25, 1
          %s249 = scalar_select %p248, %s25, 1
          %p250 = scmp.lt.s32.totalorder %s247, 1
          %s251 = scalar_select %p250, %s247, 1
          %p252 = scmp.lt.s32.totalorder %s26, 0
          %s253 = scalar_select %p252, %s26, 0
          %s254 = sadd.s32 %s253, %s251
          %s255 = smul.addr %s249, 2
          %s256 = sadd.s32 %s254, %s255
          %s257 = smul.addr %s256, 8
          %s258 = scalar_lea.vmem %s0, %s257
          %s259 = smul.u32 2, %s27
        $region24: #{tpu_custom_call.1} parent=19 // pred_fallthru
          _
        // Predicated region
        $region25: #{tpu_custom_call.1} parent=19 // pred_check
          %p260 = pneg %p91
        $region26: #{tpu_custom_call.1} parent=19 // pred_check_branch
          %262 = sbr.rel (%p260) target = $region28
        $region27: #{tpu_custom_call.1} parent=19 // pred_region
          %p263 = scmp.lt.s32.totalorder %s25, 1
          %s264 = scalar_select %p263, %s25, 1
          %p265 = scmp.lt.s32.totalorder %s27, 0
          %s266 = scalar_select %p265, %s27, 0
          %p267 = scmp.lt.s32.totalorder %s26, 0
          %s268 = scalar_select %p267, %s26, 0
          %s269 = sadd.s32 %s268, %s266
          %s270 = sadd.s32 %s269, %s264
          %s271 = scalar_lea.vmem %s1, %s270
        $region28: #{tpu_custom_call.1} parent=19 // pred_fallthru
          _
        // Predicated region
        $region29: #{tpu_custom_call.1} parent=19 // pred_check
          %p272 = pneg %p121
        $region30: #{tpu_custom_call.1} parent=19 // pred_check_branch
          %274 = sbr.rel (%p272) target = $region32
        $region31: #{tpu_custom_call.1} parent=19 // pred_region
          %s275 = sand.u32 %s111, 1
          %s276 = scalar_lea.sflag [#allocation3], %s275
          %s277 = sand.u32 %s111, 1
          %s278 = scalar_lea.vmem [#allocation2], %s277
          %280 = vsyncadd %s276, 0
          %s281 = sadd.s32 %s26, %s27
          %s282 = sadd.s32 %s281, %s25
          %s283 = scalar_lea.hbm %s2, %s282
          %s285 = sshll.u32 %s283, 4
          %s286 = int_to_ptr.hbm [resolvable:$true] %s285
          %s287 = sshll.u32 %s278, 4
          %s288 = int_to_ptr.vmem [resolvable:$true] %s287
          %290 = dma.hbm_to_vmem [thread:$0]  %s286, 16, %s288, %s276
        $region32: #{tpu_custom_call.1} parent=19 // pred_fallthru
          _
        // Predicated region
        $region33: #{tpu_custom_call.1} parent=19 // pred_check
          %p291 = pneg %p175
        $region34: #{tpu_custom_call.1} parent=19 // pred_check_branch
          %293 = sbr.rel (%p291) target = $region36
        $region35: #{tpu_custom_call.1} parent=19 // pred_region
          %s294 = smul.u32 2, %s27
          %p295 = scmp.lt.s32.totalorder %s25, 1
          %s296 = scalar_select %p295, %s25, 1
          %p297 = scmp.lt.s32.totalorder %s294, 1
          %s298 = scalar_select %p297, %s294, 1
          %s299 = smul.addr %s296, 2
          %s300 = sadd.s32 %s298, %s299
          %s301 = smul.addr %s300, 8
          %s302 = scalar_lea.vmem %s4, %s301
          %s303 = smul.u32 2, %s27
        $region36: #{tpu_custom_call.1} parent=19 // pred_fallthru
          _
      $region20: #{tpu_custom_call.1} parent=5 // pred_fallthru
        _
      %p304 = scmp.le.s32.totalorder 1, %s18
      %p305 = scmp.lt.s32.totalorder %s18, 3
      %p306 = pnand %p304, %p305
      %p307 = pneg %p306
      // Predicated region
      $region37: #{tpu_custom_call.1} parent=5 // pred_check
        _
      $region38: #{tpu_custom_call.1} parent=5 // pred_check_branch
        %309 = sbr.rel (%p306) target = $region40
      $region39: #{tpu_custom_call.1} parent=5 // pred_region
        %s310 = ssub.s32 %s18, 1
        %s311 = sand.u32 %s114, 1
        %s312 = scalar_lea.sflag [#allocation3], %s311
        %s313 = sand.u32 %s114, 1
        %s314 = scalar_lea.vmem [#allocation2], %s313
        // Predicated region
        $region41: #{tpu_custom_call.1} parent=39 // pred_check
          %p315 = pneg %p127
        $region42: #{tpu_custom_call.1} parent=39 // pred_check_branch
          %317 = sbr.rel (%p315) target = $region44
        $region43: #{tpu_custom_call.1} parent=39 // pred_region
          %319 = dma.done %s312, 16
        $region44: #{tpu_custom_call.1} parent=39 // pred_fallthru
          _
        // Predicated region
        $region45: #{tpu_custom_call.1} parent=39 // pred_check
          %p320 = pneg %p153
        $region46: #{tpu_custom_call.1} parent=39 // pred_check_branch
          %322 = sbr.rel (%p320) target = $region48
        $region47: #{tpu_custom_call.1} parent=39 // pred_region
          %324 = dma.done [#allocation6], 64
        $region48: #{tpu_custom_call.1} parent=39 // pred_fallthru
          _
        %s325 = smul.u32 2, %s30
        %p326 = scmp.lt.s32.totalorder %s28, 1
        %s327 = scalar_select %p326, %s28, 1
        %p328 = scmp.lt.s32.totalorder %s325, 1
        %s329 = scalar_select %p328, %s325, 1
        %p330 = scmp.lt.s32.totalorder %s29, 0
        %s331 = scalar_select %p330, %s29, 0
        %s332 = sadd.s32 %s331, %s329
        %s333 = smul.addr %s327, 2
        %s334 = sadd.s32 %s332, %s333
        %s335 = smul.addr %s334, 8
        %s336 = scalar_lea.vmem %s0, %s335
        %p337 = pneg %p67
        %p338 = pneg %p64
        %p339 = scmp.lt.s32.totalorder %s28, 1
        %s340 = scalar_select %p339, %s28, 1
        %p341 = scmp.lt.s32.totalorder %s30, 0
        %s342 = scalar_select %p341, %s30, 0
        %p343 = scmp.lt.s32.totalorder %s29, 0
        %s344 = scalar_select %p343, %s29, 0
        %s345 = sadd.s32 %s344, %s342
        %s346 = sadd.s32 %s345, %s340
        %s347 = scalar_lea.vmem %s1, %s346
        %p348 = pneg %p97
        %p349 = pneg %p94
        %s350 = sand.u32 %s114, 1
        %s351 = scalar_lea.sflag [#allocation3], %s350
        %s352 = sand.u32 %s114, 1
        %s353 = scalar_lea.vmem [#allocation2], %s352
        %p354 = pneg %p127
        %p355 = pneg %p124
        %p356 = pneg %p153
        %p357 = pneg %p150
        %s358 = smul.u32 2, %s30
        %p359 = scmp.lt.s32.totalorder %s28, 1
        %s360 = scalar_select %p359, %s28, 1
        %p361 = scmp.lt.s32.totalorder %s358, 1
        %s362 = scalar_select %p361, %s358, 1
        %s363 = smul.addr %s360, 2
        %s364 = sadd.s32 %s362, %s363
        %s365 = smul.addr %s364, 8
        %s366 = scalar_lea.vmem %s4, %s365
        %p367 = pneg %p181
        %p368 = pneg %p178
        %p369 = pneg %p211
        %p370 = pneg %p208
        %s371 = sand.u32 %s198, 1
        %s372 = scalar_lea.sflag [#allocation4], %s371
        %s373 = sand.u32 %s198, 1
        %s374 = smul.addr %s373, 16
        %s375 = scalar_lea.vmem [#allocation7], %s374
        %s376 = smul.u32 2, %s30
        %p377 = scmp.lt.s32.totalorder %s28, 1
        %s378 = scalar_select %p377, %s28, 1
        %p379 = scmp.lt.s32.totalorder %s376, 1
        %s380 = scalar_select %p379, %s376, 1
        %p381 = scmp.lt.s32.totalorder %s29, 0
        %s382 = scalar_select %p381, %s29, 0
        %s383 = sadd.s32 %s382, %s380
        %s384 = smul.addr %s378, 2
        %s385 = sadd.s32 %s383, %s384
        %s386 = smul.addr %s385, 8
        %s387 = scalar_lea.vmem %s0, %s386
        %s388 = smul.u32 2, %s30
        %p389 = scmp.lt.s32.totalorder %s28, 1
        %s390 = scalar_select %p389, %s28, 1
        %p391 = scmp.lt.s32.totalorder %s30, 0
        %s392 = scalar_select %p391, %s30, 0
        %p393 = scmp.lt.s32.totalorder %s29, 0
        %s394 = scalar_select %p393, %s29, 0
        %s395 = sadd.s32 %s394, %s392
        %s396 = sadd.s32 %s395, %s390
        %s397 = scalar_lea.vmem %s1, %s396
        %s398 = smul.u32 2, %s30
        %p399 = scmp.lt.s32.totalorder %s28, 1
        %s400 = scalar_select %p399, %s28, 1
        %p401 = scmp.lt.s32.totalorder %s398, 1
        %s402 = scalar_select %p401, %s398, 1
        %s403 = smul.addr %s400, 2
        %s404 = sadd.s32 %s402, %s403
        %s405 = smul.addr %s404, 8
        %s406 = scalar_lea.vmem %s4, %s405
        %s407 = smul.u32 2, %s30
        %s408 = smul.u32 2, %s30
        %v409 = vld [vmem:[%s387] sm:$0xff]
        %v410 = vld [vmem:[%s387 + $0x8] sm:$0xff]
        %v411 = vld [vmem:[%s397] sm:$0x1]
        %v412 = vld [vmem:[%s314] sm:$0x1]
        %vm415 = vcmask 1040384
        %v416 = vrot.slane %v409, 7
        %v417 = vrot.slane %v410, 7
        %v418 = vsel %vm415, %v416, %v417
        %v423 = vperm.slane %v412, 0
        %v425 = vsel %vm415, %v411, %v416
        %v426 = vsel %vm415, %v417, %v423
        %v427 = vld [vmem:[#allocation5] sm:$0x7]
        %v428 = vperm.slane %v427, 0
        %v429 = vmul.f32 %v425, %v428
        %v430 = vmul.f32 %v418, %v428
        %v431 = vperm.slane %v427, 1
        %v432 = vmul.f32 %v425, %v431
        %v433 = vmul.f32 %v418, %v431
        %v434 = vmul.f32 %v426, %v431
        %vm438 = vcmask 1046528
        %v439 = vrot.slane %v432, 1
        %v440 = vrot.slane %v433, 1
        %v441 = vsel %vm438, %v439, %v440
        %v442 = vrot.slane %v434, 1
        %v443 = vsel %vm438, %v440, %v442
        %v446 = vadd.f32 %v429, %v441
        %v447 = vadd.f32 %v430, %v443
        %v448 = vperm.slane %v427, 2
        %v449 = vmul.f32 %v425, %v448
        %v450 = vmul.f32 %v418, %v448
        %v451 = vmul.f32 %v426, %v448
        %vm455 = vcmask 1045504
        %v456 = vrot.slane %v449, 2
        %v457 = vrot.slane %v450, 2
        %v458 = vsel %vm455, %v456, %v457
        %v459 = vrot.slane %v451, 2
        %v460 = vsel %vm455, %v457, %v459
        %v463 = vadd.f32 %v446, %v458
        %v464 = vadd.f32 %v447, %v460
        %v465 = vld [vmem:[%s406] sm:$0xff]
        %v466 = vld [vmem:[%s406 + $0x8] sm:$0xff]
        %468 = vset.pattern.permute.xlu0 0
        %469 = vperm.xlu0 %468, %v465
        %v470 = vpop.permute.xlu0 %469
        %473 = vset.pattern.permute.xlu0 0
        %474 = vperm.xlu0 %473, %v466
        %v475 = vpop.permute.xlu0 %474
        %v477 = vmul.f32 %v463, %v470
        %v478 = vmul.f32 %v464, %v475
        %vm479 = vcmask 261120
        %480 = vst.msk [vmem:[%s375] sm:$0xff] %vm479, %v477
        %481 = vst.msk [vmem:[%s375 + $0x8] sm:$0xff] %vm479, %v478
        %s482 = sand.u32 %s198, 1
        %s483 = scalar_lea.sflag [#allocation4], %s482
        %s484 = sand.u32 %s198, 1
        %s485 = smul.addr %s484, 16
        %s486 = scalar_lea.vmem [#allocation7], %s485
        // Predicated region
        $region49: #{tpu_custom_call.1} parent=39 // pred_check
          %p487 = pneg %p208
        $region50: #{tpu_custom_call.1} parent=39 // pred_check_branch
          %489 = sbr.rel (%p487) target = $region52
        $region51: #{tpu_custom_call.1} parent=39 // pred_region
          %s490 = smul.u32 2, %s30
          %492 = vsyncadd %s483, 0
          %s493 = sadd.s32 %s29, %s490
          %s494 = smul.addr %s28, 2
          %s495 = sadd.s32 %s493, %s494
          %s496 = smul.addr %s495, 8
          %s497 = scalar_lea.hbm %s5, %s496
          %s498 = sshll.u32 %s486, 4
          %s499 = int_to_ptr.vmem [resolvable:$true] %s498
          %s500 = sshll.u32 %s497, 4
          %s501 = int_to_ptr.hbm [resolvable:$true] %s500
          %506 = dma.vmem_to_hbm [thread:$0]  %s499, 256, %s501, %s483, 128, 128, 8
        $region52: #{tpu_custom_call.1} parent=39 // pred_fallthru
          _
      $region40: #{tpu_custom_call.1} parent=5 // pred_fallthru
        _
      %p507 = scmp.le.s32.totalorder 2, %s18
      // Predicated region
      $region53: #{tpu_custom_call.1} parent=5 // pred_check
        %p508 = pneg %p507
      $region54: #{tpu_custom_call.1} parent=5 // pred_check_branch
        %510 = sbr.rel (%p508) target = $region56
      $region55: #{tpu_custom_call.1} parent=5 // pred_region
        %s511 = ssub.s32 %s18, 2
        // Predicated region
        $region57: #{tpu_custom_call.1} parent=55 // pred_check
          %p512 = pneg %p214
        $region58: #{tpu_custom_call.1} parent=55 // pred_check_branch
          %514 = sbr.rel (%p512) target = $region60
        $region59: #{tpu_custom_call.1} parent=55 // pred_region
          %s515 = sand.u32 %s199, 1
          %s516 = scalar_lea.sflag [#allocation4], %s515
          %s517 = sand.u32 %s199, 1
          %s518 = smul.addr %s517, 16
          %s519 = scalar_lea.vmem [#allocation7], %s518
          %521 = dma.done %s516, 256
        $region60: #{tpu_custom_call.1} parent=55 // pred_fallthru
          _
      $region56: #{tpu_custom_call.1} parent=5 // pred_fallthru
        _
    $region6: #{tpu_custom_call.1} parent=1 // loop_footer
      %s22 = sadd.s32 1, %s18
    $region7: #{tpu_custom_call.1} parent=1 // loop_footer_branch
      %17 = sbr.rel target = $region3
    $region8: #{tpu_custom_call.1} parent=1 // loop_exit
      _
    %522 = vsyncpa [#allocation3], 1
    %s523 = scalar_lea.sflag [#allocation3], 1
    %524 = vsyncpa %s523, 1
    %525 = vsyncpa [#allocation6], 1
    %526 = vsyncpa [#allocation4], 1
    %s527 = scalar_lea.sflag [#allocation4], 1
    %528 = vsyncpa %s527, 1

</llo_original>
